<compile_context>
chip_gen: v7x
topology: tpu7x:2x2x1
jax: 0.10.0
libtpu: 0.0.40
codegen_flags: <defaults>
</compile_context>

<pallas_src>
import jax
import jax.numpy as jnp
from jax.experimental import pallas as pl
from jax.experimental.pallas import tpu as pltpu

_LANE = 512                      # lane-dense last dim (multiple of 128)
_PALLAS_MIN_ELEMS = 64 * 1024    # below this, fused pure-JAX beats a kernel launch


# ---------------------------------------------------------------- kernels ---

def _pid_kernel_out_only(coef_ref, cur_ref, tgt_ref, out_ref):
    # coef = [c1, c0, dt, i0] in SMEM; only c1/c0 needed here.
    c1 = coef_ref[0]
    c0 = coef_ref[1]
    out_ref[...] = c1 * (tgt_ref[...] - cur_ref[...]) + c0


def _pid_kernel_with_state(coef_ref, cur_ref, tgt_ref, out_ref, integ_ref, prev_ref):
    c1 = coef_ref[0]
    c0 = coef_ref[1]
    dt = coef_ref[2]
    i0 = coef_ref[3]
    error = tgt_ref[...] - cur_ref[...]
    out_ref[...] = c1 * error + c0
    integ_ref[...] = i0 + dt * error
    prev_ref[...] = error            # .detach() is a no-op in the forward pass


# ------------------------------------------------------------- tile sizing ---

def _round_up(x, m):
    return ((x + m - 1) // m) * m


def _vmem_capacity_bytes():
    try:
        return int(pltpu.get_tpu_info().vmem_capacity_bytes)
    except Exception:
        return 64 << 20   # v7x per-TensorCore capacity; safe lower bound


def _choose_tile_rows(rows_needed, n_streamed_arrays):
    """Rows per block: multiple of 8, sized so double-buffered streams fit VMEM."""
    vmem = _vmem_capacity_bytes()
    budget = vmem // 4                                   # headroom
    per_row = n_streamed_arrays * 2 * _LANE * 4          # 2 = double buffer, f32
    tile = max(8, (budget // per_row) // 8 * 8)
    tile = min(tile, 2048)                               # ~4 MiB/buffer is plenty
    tile = min(tile, _round_up(rows_needed, 8))
    return tile


# ------------------------------------------------------------ pallas runner ---

def _run_pallas(cur, tgt, coefs, return_state):
    shape = cur.shape
    total = cur.size
    n_arrays = 5 if return_state else 3

    rows_needed = max(1, -(-total // _LANE))
    tile_rows = _choose_tile_rows(rows_needed, n_arrays)
    rows = _round_up(rows_needed, tile_rows)
    padded = rows * _LANE

    flat_c = cur.reshape(-1)
    flat_t = tgt.reshape(-1)
    if padded != total:
        flat_c = jnp.pad(flat_c, (0, padded - total))
        flat_t = jnp.pad(flat_t, (0, padded - total))
    cur2d = flat_c.reshape(rows, _LANE)
    tgt2d = flat_t.reshape(rows, _LANE)

    grid = (rows // tile_rows,)
    data_spec = pl.BlockSpec((tile_rows, _LANE), lambda i: (i, 0))
    smem_spec = pl.BlockSpec((4,), lambda i: (0,),
                             memory_space=pltpu.MemorySpace.SMEM)

    tile_bytes = tile_rows * _LANE * 4
    vmem_limit = min(max(n_arrays * 2 * tile_bytes * 2, 16 << 20),
                     _vmem_capacity_bytes())
    compiler_params = pltpu.CompilerParams(
        dimension_semantics=("parallel",),     # lets v7x shard rows over 2 TCs
        vmem_limit_bytes=vmem_limit,
    )

    if return_state:
        out2d, integ2d, prev2d = pl.pallas_call(
            _pid_kernel_with_state,
            out_shape=(jax.ShapeDtypeStruct((rows, _LANE), jnp.float32),) * 3,
            grid=grid,
            in_specs=[smem_spec, data_spec, data_spec],
            out_specs=(data_spec, data_spec, data_spec),
            compiler_params=compiler_params,
        )(coefs, cur2d, tgt2d)
        unpack = lambda a: a.reshape(-1)[:total].reshape(shape)
        return unpack(out2d), unpack(integ2d), unpack(prev2d)

    out2d = pl.pallas_call(
        _pid_kernel_out_only,
        out_shape=jax.ShapeDtypeStruct((rows, _LANE), jnp.float32),
        grid=grid,
        in_specs=[smem_spec, data_spec, data_spec],
        out_specs=data_spec,
        compiler_params=compiler_params,
    )(coefs, cur2d, tgt2d)
    return out2d.reshape(-1)[:total].reshape(shape)


# ----------------------------------------------------------------- wrapper ---

def pid_forward(current_value, target_value, dt, kp, ki, kd,
                integral_term=0.0, prev_error=0.0,
                *, return_state=True, use_pallas=None):
    """PIDNet.forward.

    Returns `output` if return_state=False, otherwise
    (output, new_integral_term, new_prev_error) — the functional equivalent of
    the module's in-place buffer updates.
    """
    cur = jnp.asarray(current_value, jnp.float32)
    tgt = jnp.asarray(target_value, jnp.float32)
    dt = jnp.asarray(dt, jnp.float32)
    kp = jnp.asarray(kp, jnp.float32)
    ki = jnp.asarray(ki, jnp.float32)
    kd = jnp.asarray(kd, jnp.float32)
    i0 = jnp.asarray(integral_term, jnp.float32)
    p0 = jnp.asarray(prev_error, jnp.float32)

    # Hoist all scalar algebra (including the divide) out of the hot path.
    inv_dt = 1.0 / dt
    c1 = kp + ki * dt + kd * inv_dt
    c0 = ki * i0 - kd * p0 * inv_dt
    coefs = jnp.stack([c1, c0, dt, i0]).astype(jnp.float32)

    if use_pallas is None:
        use_pallas = cur.size >= _PALLAS_MIN_ELEMS
    if i0.ndim != 0 or p0.ndim != 0:
        use_pallas = False   # tensor-shaped carried state -> pure-JAX path

    if not use_pallas:
        # Tiny inputs (or tensor state): let XLA fuse this into neighbors.
        error = tgt - cur
        output = kp * error + ki * (i0 + error * dt) + kd * (error - p0) * inv_dt
        if not return_state:
            return output
        return output, i0 + error * dt, error

    return _run_pallas(cur, tgt, coefs, return_state)


def pid_forward_ref(current_value, target_value, dt, kp, ki, kd,
                    integral_term=0.0, prev_error=0.0):
    """Pure-JAX reference mirroring PIDNet.forward exactly."""
    error = target_value - current_value
    integral = integral_term + error * dt
    derivative = (error - prev_error) / dt
    output = kp * error + ki * integral + kd * derivative
    return output, integral, error


# -------------------------------------------------------------------- demo ---

if __name__ == "__main__":
    key = jax.random.PRNGKey(0)
    k1, k2, k3, k4 = jax.random.split(key, 4)

    kp, ki, kd = 1.5, 0.3, 0.05
    dt = 0.05
    integral0 = 0.0   # register_buffer init
    prev0 = 0.0       # register_buffer init

    # Case 1: lane-aligned small batch, Pallas path, full state returned.
    B, N = 8, 128
    cur1 = jax.random.normal(k1, (B, N), dtype=jnp.float32)
    tgt1 = jax.random.normal(k2, (B, N), dtype=jnp.float32)
    out1, integ1, prev1 = pid_forward(cur1, tgt1, dt, kp, ki, kd,
                                      integral0, prev0,
                                      return_state=True, use_pallas=True)
    jax.block_until_ready((out1, integ1, prev1))
    r_out1, r_int1, r_prev1 = pid_forward_ref(cur1, tgt1, dt, kp, ki, kd,
                                              integral0, prev0)
    assert jnp.allclose(out1, r_out1, atol=2e-5, rtol=1e-5)
    assert jnp.allclose(integ1, r_int1, atol=2e-5, rtol=1e-5)
    assert jnp.allclose(prev1, r_prev1, atol=2e-5, rtol=1e-5)

    # Case 2: awkward (non-128-multiple) shape exercises the padding path,
    # output-only mode (3x HBM traffic).
    cur2 = jax.random.normal(k3, (3, 50), dtype=jnp.float32)
    tgt2 = jax.random.normal(k4, (3, 50), dtype=jnp.float32)
    out2 = pid_forward(cur2, tgt2, dt, kp, ki, kd, integral0, prev0,
                       return_state=False, use_pallas=True)
    jax.block_until_ready(out2)
    r_out2, _, _ = pid_forward_ref(cur2, tgt2, dt, kp, ki, kd, integral0, prev0)
    assert out2.shape == (3, 50)
    assert jnp.allclose(out2, r_out2, atol=2e-5, rtol=1e-5)

    # Case 3: tiny input auto-dispatches to the fused pure-JAX fast path.
    out3, integ3, prev3 = pid_forward(cur1, tgt1, dt, kp, ki, kd,
                                      integral0, prev0)
    jax.block_until_ready((out3, integ3, prev3))
    assert jnp.allclose(out3, r_out1, atol=2e-5, rtol=1e-5)
    assert jnp.allclose(integ3, r_int1, atol=2e-5, rtol=1e-5)

    print("KERNEL_OK")
</pallas_src>

<mosaic_0001>
module attributes {stable_mosaic.version = 11 : i64} {
  func.func @_pid_kernel_with_state(%arg0: i32, %arg1: memref<4xf32, #tpu.memory_space<smem>>, %arg2: memref<8x512xf32, #tpu.memory_space<vmem>>, %arg3: memref<8x512xf32, #tpu.memory_space<vmem>>, %arg4: memref<8x512xf32, #tpu.memory_space<vmem>>, %arg5: memref<8x512xf32, #tpu.memory_space<vmem>>, %arg6: memref<8x512xf32, #tpu.memory_space<vmem>>) attributes {dimension_semantics = [#tpu.dimension_semantics<parallel>], iteration_bounds = array<i64: 1>, scalar_prefetch = 0 : i64, scratch_operands = 0 : i64, tpu.core_type = #tpu.core_type<tc>, window_params = [{transform_indices = @transform_0, window_bounds = array<i64: 4>}, {transform_indices = @transform_1, window_bounds = array<i64: 8, 512>}, {transform_indices = @transform_2, window_bounds = array<i64: 8, 512>}, {transform_indices = @transform_3, window_bounds = array<i64: 8, 512>}, {transform_indices = @transform_4, window_bounds = array<i64: 8, 512>}, {transform_indices = @transform_5, window_bounds = array<i64: 8, 512>}]} {
    %c0 = arith.constant 0 : index
    %0 = memref.load %arg1[%c0] : memref<4xf32, #tpu.memory_space<smem>>
    %c1 = arith.constant 1 : index
    %1 = memref.load %arg1[%c1] : memref<4xf32, #tpu.memory_space<smem>>
    %c2 = arith.constant 2 : index
    %2 = memref.load %arg1[%c2] : memref<4xf32, #tpu.memory_space<smem>>
    %c3 = arith.constant 3 : index
    %3 = memref.load %arg1[%c3] : memref<4xf32, #tpu.memory_space<smem>>
    %c0_0 = arith.constant 0 : index
    %c0_1 = arith.constant 0 : index
    %4 = vector.load %arg3[%c0_0, %c0_1] : memref<8x512xf32, #tpu.memory_space<vmem>>, vector<8x512xf32>
    %c0_2 = arith.constant 0 : index
    %c0_3 = arith.constant 0 : index
    %5 = vector.load %arg2[%c0_2, %c0_3] : memref<8x512xf32, #tpu.memory_space<vmem>>, vector<8x512xf32>
    %6 = arith.subf %4, %5 : vector<8x512xf32>
    %7 = vector.broadcast %0 : f32 to vector<8x512xf32>
    %8 = arith.mulf %7, %6 : vector<8x512xf32>
    %9 = vector.broadcast %1 : f32 to vector<8x512xf32>
    %10 = arith.addf %8, %9 : vector<8x512xf32>
    %c0_4 = arith.constant 0 : index
    %c0_5 = arith.constant 0 : index
    %11 = vector.load %arg4[%c0_4, %c0_5] : memref<8x512xf32, #tpu.memory_space<vmem>>, vector<8x512xf32>
    tpu.vector_store %arg4[%c0_4, %c0_5], %10 {strides = array<i32>} : memref<8x512xf32, #tpu.memory_space<vmem>>, vector<8x512xf32>,
    %12 = vector.broadcast %2 : f32 to vector<8x512xf32>
    %13 = arith.mulf %12, %6 : vector<8x512xf32>
    %14 = vector.broadcast %3 : f32 to vector<8x512xf32>
    %15 = arith.addf %14, %13 : vector<8x512xf32>
    %c0_6 = arith.constant 0 : index
    %c0_7 = arith.constant 0 : index
    %16 = vector.load %arg5[%c0_6, %c0_7] : memref<8x512xf32, #tpu.memory_space<vmem>>, vector<8x512xf32>
    tpu.vector_store %arg5[%c0_6, %c0_7], %15 {strides = array<i32>} : memref<8x512xf32, #tpu.memory_space<vmem>>, vector<8x512xf32>,
    %c0_8 = arith.constant 0 : index
    %c0_9 = arith.constant 0 : index
    %17 = vector.load %arg6[%c0_8, %c0_9] : memref<8x512xf32, #tpu.memory_space<vmem>>, vector<8x512xf32>
    tpu.vector_store %arg6[%c0_8, %c0_9], %6 {strides = array<i32>} : memref<8x512xf32, #tpu.memory_space<vmem>>, vector<8x512xf32>,
    return
  }
  func.func @transform_0(%arg0: i32) -> i32 {
    %c0_i32 = arith.constant 0 : i32
    %c0_i32_0 = arith.constant 0 : i32
    return %c0_i32 : i32
  }
  func.func @transform_1(%arg0: i32) -> (i32, i32) {
    %c0_i32 = arith.constant 0 : i32
    %c0_i32_0 = arith.constant 0 : i32
    return %arg0, %c0_i32 : i32, i32
  }
  func.func @transform_2(%arg0: i32) -> (i32, i32) {
    %c0_i32 = arith.constant 0 : i32
    %c0_i32_0 = arith.constant 0 : i32
    return %arg0, %c0_i32 : i32, i32
  }
  func.func @transform_3(%arg0: i32) -> (i32, i32) {
    %c0_i32 = arith.constant 0 : i32
    %c0_i32_0 = arith.constant 0 : i32
    return %arg0, %c0_i32 : i32, i32
  }
  func.func @transform_4(%arg0: i32) -> (i32, i32) {
    %c0_i32 = arith.constant 0 : i32
    %c0_i32_0 = arith.constant 0 : i32
    return %arg0, %c0_i32 : i32, i32
  }
  func.func @transform_5(%arg0: i32) -> (i32, i32) {
    %c0_i32 = arith.constant 0 : i32
    %c0_i32_0 = arith.constant 0 : i32
    return %arg0, %c0_i32 : i32, i32
  }
}

</mosaic_0001>

<llo_original>
// kernel: tpu_custom_call.1
$region0: #{tpu_custom_call.1}
  #allocation0 [shape = 'u32[]', space=smem, size = 0x4, offset = 0x4, fixed_abs, tag = 'smem constant byte address 0x4 - core index']
  #allocation1 [shape = 'u32[144,128]{1,0:T(1,128)}', space=vmem, size = 0x12000, scoped, tag = 'internal scratch']
  %s0 = inlined_call_operand.hbm [shape: f32[4], index: 0, kind: input, shape index: {}]
  %s1 = inlined_call_operand.hbm [shape: f32[8,512], index: 1, kind: input, shape index: {}]
  %s2 = inlined_call_operand.hbm [shape: f32[8,512], index: 2, kind: input, shape index: {}]
  %s3 = inlined_call_operand.hbm [shape: f32[8,512], index: 3, kind: output, shape index: {0}]
  %s4 = inlined_call_operand.hbm [shape: f32[8,512], index: 4, kind: output, shape index: {1}]
  %s5 = inlined_call_operand.hbm [shape: f32[8,512], index: 5, kind: output, shape index: {2}]
  %6 = xla_tuple %s3, %s4, %s5
  %s7 = sld [smem:[#allocation0]]
  $region50: #{tpu_custom_call.1} parent=0
    _
  %s9 = ssub.s32 1, %s7
  %s10 = scalar_select 0, %s9, %s7
  $region1: #{tpu_custom_call.1} parent=0
    #allocation2 [shape = 'u8[512]{0}', space=smem, size = 0x200, scoped, tag = 'input window, operand 0, single buffered']
    #allocation3 [shape = 's32[1]{0}', space=sflag, size = 0x4, scoped, tag = 'scoped memory for tpu_custom_call.1']
    #allocation4 [shape = 's32[1]{0}', space=sflag, size = 0x4, scoped, tag = 'scoped memory for tpu_custom_call.1']
    #allocation5 [shape = 's32[1]{0}', space=sflag, size = 0x4, scoped, tag = 'scoped memory for tpu_custom_call.1']
    #allocation6 [shape = 'u8[16384]{0}', space=vmem, size = 0x4000, scoped, tag = 'input window, operand 1, single buffered']
    #allocation7 [shape = 'u8[16384]{0}', space=vmem, size = 0x4000, scoped, tag = 'input window, operand 2, single buffered']
    #allocation8 [shape = 's32[1]{0}', space=sflag, size = 0x4, scoped, tag = 'scoped memory for tpu_custom_call.1']
    #allocation9 [shape = 'u8[16384]{0}', space=vmem, size = 0x4000, scoped, tag = 'output window, operand 0, single buffered']
    #allocation10 [shape = 'u8[16384]{0}', space=vmem, size = 0x4000, scoped, tag = 'output window, operand 1, single buffered']
    #allocation11 [shape = 's32[1]{0}', space=sflag, size = 0x4, scoped, tag = 'scoped memory for tpu_custom_call.1']
    #allocation12 [shape = 'u8[16384]{0}', space=vmem, size = 0x4000, scoped, tag = 'output window, operand 2, single buffered']
    %11 = vsyncpa [#allocation5], 0
    %12 = vsyncpa [#allocation3], 0
    %13 = vsyncpa [#allocation8], 0
    %14 = vsyncpa [#allocation4], 0
    %15 = vsyncpa [#allocation11], 0
    // Predicated region
    $region2: #{tpu_custom_call.1} parent=1 // pred_check
      _
    $region3: #{tpu_custom_call.1} parent=1 // pred_check_branch
      %17 = sbr.rel (0) target = $region5
    $region4: #{tpu_custom_call.1} parent=1 // pred_region
      %s19 = ssub.s32 16, 16
      %20 = vsyncadd [#allocation5], %s19
      %23 = dma.hbm_to_smem %s0, 16, [#allocation2], [#allocation5]
    $region5: #{tpu_custom_call.1} parent=1 // pred_fallthru
      _
    // Predicated region
    $region6: #{tpu_custom_call.1} parent=1 // pred_check
      _
    $region7: #{tpu_custom_call.1} parent=1 // pred_check_branch
      %25 = sbr.rel (0) target = $region9
    $region8: #{tpu_custom_call.1} parent=1 // pred_region
      %s27 = ssub.s32 512, 512
      %28 = vsyncadd [#allocation3], %s27
      %s30 = sshll.u32 [#allocation6], 4
      %s31 = int_to_ptr.vmem [resolvable:$true] %s30
      %33 = dma.hbm_to_vmem [thread:$0]  %s1, 512, %s31, [#allocation3]
    $region9: #{tpu_custom_call.1} parent=1 // pred_fallthru
      _
    // Predicated region
    $region10: #{tpu_custom_call.1} parent=1 // pred_check
      _
    $region11: #{tpu_custom_call.1} parent=1 // pred_check_branch
      %35 = sbr.rel (0) target = $region13
    $region12: #{tpu_custom_call.1} parent=1 // pred_region
      %s37 = ssub.s32 512, 512
      %38 = vsyncadd [#allocation8], %s37
      %s40 = sshll.u32 [#allocation7], 4
      %s41 = int_to_ptr.vmem [resolvable:$true] %s40
      %43 = dma.hbm_to_vmem [thread:$0]  %s2, 512, %s41, [#allocation8]
    $region13: #{tpu_custom_call.1} parent=1 // pred_fallthru
      _
    // Predicated region
    $region14: #{tpu_custom_call.1} parent=1 // pred_check
      _
    $region15: #{tpu_custom_call.1} parent=1 // pred_check_branch
      %45 = sbr.rel (0) target = $region17
    $region16: #{tpu_custom_call.1} parent=1 // pred_region
      %46 = dma.done [#allocation5], 16
    $region17: #{tpu_custom_call.1} parent=1 // pred_fallthru
      _
    // Predicated region
    $region18: #{tpu_custom_call.1} parent=1 // pred_check
      _
    $region19: #{tpu_custom_call.1} parent=1 // pred_check_branch
      %48 = sbr.rel (0) target = $region21
    $region20: #{tpu_custom_call.1} parent=1 // pred_region
      %49 = dma.done [#allocation3], 512
    $region21: #{tpu_custom_call.1} parent=1 // pred_fallthru
      _
    // Predicated region
    $region22: #{tpu_custom_call.1} parent=1 // pred_check
      _
    $region23: #{tpu_custom_call.1} parent=1 // pred_check_branch
      %51 = sbr.rel (0) target = $region25
    $region24: #{tpu_custom_call.1} parent=1 // pred_region
      %52 = dma.done [#allocation8], 512
    $region25: #{tpu_custom_call.1} parent=1 // pred_fallthru
      _
    %53 = sfence
    %s54 = sld [smem:[#allocation2]]
    %s55 = sld [smem:[#allocation2 + $0x1]]
    %s56 = sld [smem:[#allocation2 + $0x2]]
    %s57 = sld [smem:[#allocation2 + $0x3]]
    %v58 = vld [vmem:[#allocation7] sm:$0xff]
    %v59 = vld [vmem:[#allocation7 + $0x8] sm:$0xff]
    %v60 = vld [vmem:[#allocation7 + $0x10] sm:$0xff]
    %v61 = vld [vmem:[#allocation7 + $0x18] sm:$0xff]
    %v62 = vld [vmem:[#allocation6] sm:$0xff]
    %v63 = vld [vmem:[#allocation6 + $0x8] sm:$0xff]
    %v64 = vld [vmem:[#allocation6 + $0x10] sm:$0xff]
    %v65 = vld [vmem:[#allocation6 + $0x18] sm:$0xff]
    %v66 = vsub.f32 %v58, %v62
    %v67 = vsub.f32 %v59, %v63
    %v68 = vsub.f32 %v60, %v64
    %v69 = vsub.f32 %v61, %v65
    %v70 = vstv %s54
    %v71 = vmul.f32 %v70, %v66
    %v72 = vmul.f32 %v70, %v67
    %v73 = vmul.f32 %v70, %v68
    %v74 = vmul.f32 %v70, %v69
    %v75 = vstv %s55
    %v76 = vadd.f32 %v71, %v75
    %v77 = vadd.f32 %v72, %v75
    %v78 = vadd.f32 %v73, %v75
    %v79 = vadd.f32 %v74, %v75
    %80 = vst [vmem:[#allocation9] sm:$0xff] %v76
    %81 = vst [vmem:[#allocation9 + $0x8] sm:$0xff] %v77
    %82 = vst [vmem:[#allocation9 + $0x10] sm:$0xff] %v78
    %83 = vst [vmem:[#allocation9 + $0x18] sm:$0xff] %v79
    %v84 = vstv %s56
    %v85 = vmul.f32 %v84, %v66
    %v86 = vmul.f32 %v84, %v67
    %v87 = vmul.f32 %v84, %v68
    %v88 = vmul.f32 %v84, %v69
    %v89 = vstv %s57
    %v90 = vadd.f32 %v89, %v85
    %v91 = vadd.f32 %v89, %v86
    %v92 = vadd.f32 %v89, %v87
    %v93 = vadd.f32 %v89, %v88
    %94 = vst [vmem:[#allocation10] sm:$0xff] %v90
    %95 = vst [vmem:[#allocation10 + $0x8] sm:$0xff] %v91
    %96 = vst [vmem:[#allocation10 + $0x10] sm:$0xff] %v92
    %97 = vst [vmem:[#allocation10 + $0x18] sm:$0xff] %v93
    %98 = vst [vmem:[#allocation12] sm:$0xff] %v66
    %99 = vst [vmem:[#allocation12 + $0x8] sm:$0xff] %v67
    %100 = vst [vmem:[#allocation12 + $0x10] sm:$0xff] %v68
    %101 = vst [vmem:[#allocation12 + $0x18] sm:$0xff] %v69
    // Predicated region
    $region26: #{tpu_custom_call.1} parent=1 // pred_check
      _
    $region27: #{tpu_custom_call.1} parent=1 // pred_check_branch
      %103 = sbr.rel (0) target = $region29
    $region28: #{tpu_custom_call.1} parent=1 // pred_region
      %s105 = ssub.s32 512, 512
      %106 = vsyncadd [#allocation4], %s105
      %s108 = sshll.u32 [#allocation9], 4
      %s109 = int_to_ptr.vmem [resolvable:$true] %s108
      %111 = dma.vmem_to_hbm [thread:$0]  %s109, 512, %s3, [#allocation4]
    $region29: #{tpu_custom_call.1} parent=1 // pred_fallthru
      _
    // Predicated region
    $region30: #{tpu_custom_call.1} parent=1 // pred_check
      _
    $region31: #{tpu_custom_call.1} parent=1 // pred_check_branch
      %113 = sbr.rel (0) target = $region33
    $region32: #{tpu_custom_call.1} parent=1 // pred_region
      %s115 = ssub.s32 512, 512
      %116 = vsyncadd [#allocation11], %s115
      %s118 = sshll.u32 [#allocation10], 4
      %s119 = int_to_ptr.vmem [resolvable:$true] %s118
      %121 = dma.vmem_to_hbm [thread:$0]  %s119, 512, %s4, [#allocation11]
    $region33: #{tpu_custom_call.1} parent=1 // pred_fallthru
      _
    // Predicated region
    $region34: #{tpu_custom_call.1} parent=1 // pred_check
      _
    $region35: #{tpu_custom_call.1} parent=1 // pred_check_branch
      %123 = sbr.rel (0) target = $region37
    $region36: #{tpu_custom_call.1} parent=1 // pred_region
      %s125 = ssub.s32 512, 512
      %126 = vsyncadd [#allocation11], %s125
      %s128 = sshll.u32 [#allocation12], 4
      %s129 = int_to_ptr.vmem [resolvable:$true] %s128
      %131 = dma.vmem_to_hbm [thread:$0]  %s129, 512, %s5, [#allocation11]
    $region37: #{tpu_custom_call.1} parent=1 // pred_fallthru
      _
    // Predicated region
    $region38: #{tpu_custom_call.1} parent=1 // pred_check
      _
    $region39: #{tpu_custom_call.1} parent=1 // pred_check_branch
      %133 = sbr.rel (0) target = $region41
    $region40: #{tpu_custom_call.1} parent=1 // pred_region
      %134 = dma.done [#allocation4], 512
    $region41: #{tpu_custom_call.1} parent=1 // pred_fallthru
      _
    // Predicated region
    $region42: #{tpu_custom_call.1} parent=1 // pred_check
      _
    $region43: #{tpu_custom_call.1} parent=1 // pred_check_branch
      %136 = sbr.rel (0) target = $region45
    $region44: #{tpu_custom_call.1} parent=1 // pred_region
      %137 = dma.done [#allocation11], 512
    $region45: #{tpu_custom_call.1} parent=1 // pred_fallthru
      _
    // Predicated region
    $region46: #{tpu_custom_call.1} parent=1 // pred_check
      _
    $region47: #{tpu_custom_call.1} parent=1 // pred_check_branch
      %139 = sbr.rel (0) target = $region49
    $region48: #{tpu_custom_call.1} parent=1 // pred_region
      %140 = dma.done [#allocation11], 512
    $region49: #{tpu_custom_call.1} parent=1 // pred_fallthru
      _
    %141 = vsyncpa [#allocation3], 1
    %142 = vsyncpa [#allocation8], 1
    %143 = vsyncpa [#allocation4], 1
    %144 = vsyncpa [#allocation11], 1
    %145 = vsyncpa [#allocation5], 1

</llo_original>
